<compile_context>
chip_gen: v6e
topology: v6e:2x2x1
jax: 0.10.0
libtpu: 0.0.40
codegen_flags: <defaults>
</compile_context>

<pallas_src>
import functools

import jax
import jax.numpy as jnp
from jax.experimental import pallas as pl
from jax.experimental.pallas import tpu as pltpu


def _cls_fc_tanh_kernel(x_ref, w_ref, b_ref, o_ref):
    # x_ref: (TM, K)  CLS-token activations tile (compute dtype)
    # w_ref: (K, TN)  weight tile, (in_features, out_features) layout
    # b_ref: (1, TN)  bias tile (f32)
    # o_ref: (TM, TN) output tile
    y = jnp.dot(x_ref[...], w_ref[...], preferred_element_type=jnp.float32)
    y = y + b_ref[...]                       # broadcast (1,TN) -> (TM,TN), f32
    o_ref[...] = jnp.tanh(y).astype(o_ref.dtype)


def _round_up(n, m):
    return ((n + m - 1) // m) * m


def prepare_bert_classification_params(weight, bias, *, compute_dtype=jnp.bfloat16):
    """One-time parameter prep; call at parameter-load time, NOT per forward.

    weight: (H_out, H_in) PyTorch nn.Linear layout; bias: (H_out,).
    Returns (w_prepared, bias_prepared) where w_prepared is (H_in, H_out) in
    `compute_dtype` (bf16 by default -> halves weight HBM traffic) and the
    bias is (1, H_out) f32 for the f32 epilogue.
    """
    H_out, H_in = weight.shape
    w_t = jnp.asarray(weight).T.astype(compute_dtype)          # (H_in, H_out)
    b2d = jnp.asarray(bias).reshape(1, H_out).astype(jnp.float32)
    return w_t, b2d


def _pick_tile_n(H_out, itemsize):
    """Lane-dense N tile: whole dim if it fits the VMEM budget, else the
    largest 128-multiple divisor.  Unaligned (tiny) dims use the full extent
    (full-array-dim blocks are exempt from the (8,128) divisibility rule)."""
    if H_out % 128 != 0:
        return H_out
    cap = 1024 if itemsize <= 2 else 512       # sized for v7x's 64 MiB VMEM
    if H_out <= cap:
        return H_out
    for tn in (cap, 512, 256, 128):
        if H_out % tn == 0:
            return tn
    return 128


@jax.jit
def bert_classification_forward(x, w_prepared, bias_prepared):
    """x: (B, S, H_in); w_prepared: (H_in, H_out); bias_prepared: (1, H_out).

    Returns (B, H_out) = tanh(x[:, 0, :] @ W.T + b), accumulated in f32.
    """
    B, S, H_in = x.shape
    K, H_out = w_prepared.shape
    assert K == H_in, "weight in_features must match x hidden size"
    compute_dtype = w_prepared.dtype
    out_dtype = x.dtype
    dt_size = jnp.dtype(compute_dtype).itemsize
    out_size = jnp.dtype(out_dtype).itemsize

    # CLS slice + activation cast (tiny: B x H_in).  Weight is already prepped.
    x_cls = x[:, 0, :].astype(compute_dtype)                   # (B, K)

    # ---- tile sizing -----------------------------------------------------
    TN = _pick_tile_n(H_out, dt_size)
    if B <= 256:
        TM, Bp = B, B                       # full-dim block, no batch padding
    else:
        TM = 256                            # multiple of 8/16/32 sublane tiles
        Bp = _round_up(B, TM)
        x_cls = jnp.pad(x_cls, ((0, Bp - B), (0, 0)))

    n_tiles = H_out // TN
    b_tiles = Bp // TM
    grid = (n_tiles, b_tiles)               # N outer, batch inner

    # ---- VMEM budget (double-buffered inputs/outputs) ----------------------
    tile_bytes = (2 * (TM * K + K * TN) * dt_size
                  + 2 * TM * TN * out_size + 2 * TN * 4)
    vmem_limit = int(min(max(tile_bytes + (2 << 20), 16 << 20), 48 << 20))

    cost = pl.CostEstimate(
        flops=2 * Bp * K * H_out,
        transcendentals=Bp * H_out,
        bytes_accessed=(Bp * K * dt_size + K * H_out * dt_size
                        + H_out * 4 + Bp * H_out * out_size),
    )

    out = pl.pallas_call(
        _cls_fc_tanh_kernel,
        out_shape=jax.ShapeDtypeStruct((Bp, H_out), out_dtype),
        grid_spec=pl.GridSpec(
            grid=grid,
            in_specs=[
                # activations: depend only on the inner (batch) index
                pl.BlockSpec((TM, K), lambda j, i: (i, 0)),
                # weight: depends only on the OUTER index -> stays resident
                # in VMEM across all batch tiles (DMA skipped when unchanged)
                pl.BlockSpec((K, TN), lambda j, i: (0, j)),
                # bias
                pl.BlockSpec((1, TN), lambda j, i: (0, j)),
            ],
            out_specs=pl.BlockSpec((TM, TN), lambda j, i: (i, j)),
        ),
        compiler_params=pltpu.CompilerParams(
            # Leading N axis parallel -> v7x's two TCs split the weight stream;
            # no-op on single-TC v5e/v6e.
            dimension_semantics=("parallel", "arbitrary"),
            vmem_limit_bytes=vmem_limit,
        ),
        cost_estimate=cost,
    )(x_cls, w_prepared, bias_prepared)

    return out[:B] if Bp != B else out


def _reference(x, weight, bias):
    cls = x[:, 0, :]
    return jnp.tanh(cls @ weight.T + bias)


if __name__ == "__main__":
    # Small shapes consistent with the module: batch=2, seq=8, hidden=32.
    B, S, H = 2, 8, 32

    key = jax.random.PRNGKey(0)
    kx, kw, kb = jax.random.split(key, 3)

    x = jax.random.normal(kx, (B, S, H), dtype=jnp.float32)
    # Deterministic synthetic parameters mimicking nn.Linear(H, H).
    weight = jax.random.normal(kw, (H, H), dtype=jnp.float32) * 0.02
    bias = jax.random.normal(kb, (H,), dtype=jnp.float32) * 0.02

    ref = _reference(x, weight, bias)

    # Default path: bf16 weights/activations, f32 accumulation + epilogue.
    w_bf16, b_prep = prepare_bert_classification_params(weight, bias)
    out = jax.block_until_ready(bert_classification_forward(x, w_bf16, b_prep))
    assert out.shape == (B, H)
    assert jnp.allclose(out, ref, atol=2e-2, rtol=2e-2), "bf16 mismatch vs reference"

    # Full-precision path (tight tolerance).
    w_f32, b_prep32 = prepare_bert_classification_params(
        weight, bias, compute_dtype=jnp.float32)
    out_f32 = jax.block_until_ready(
        bert_classification_forward(x, w_f32, b_prep32))
    assert jnp.allclose(out_f32, ref, atol=1e-5, rtol=1e-5), "f32 mismatch vs reference"

    print("KERNEL_OK")
</pallas_src>

<mosaic_0001>
module attributes {stable_mosaic.version = 11 : i64} {
  func.func @_cls_fc_tanh_kernel(%arg0: i32, %arg1: i32, %arg2: memref<2x32xbf16, #tpu.memory_space<vmem>>, %arg3: memref<32x32xbf16, #tpu.memory_space<vmem>>, %arg4: memref<1x32xf32, #tpu.memory_space<vmem>>, %arg5: memref<2x32xf32, #tpu.memory_space<vmem>>) attributes {dimension_semantics = [#tpu.dimension_semantics<parallel>, #tpu.dimension_semantics<arbitrary>], iteration_bounds = array<i64: 1, 1>, scalar_prefetch = 0 : i64, scratch_operands = 0 : i64, tpu.core_type = #tpu.core_type<tc>, window_params = [{transform_indices = @transform_0, window_bounds = array<i64: 2, 32>}, {transform_indices = @transform_1, window_bounds = array<i64: 32, 32>}, {transform_indices = @transform_2, window_bounds = array<i64: 1, 32>}, {transform_indices = @transform_3, window_bounds = array<i64: 2, 32>}]} {
    %c0 = arith.constant 0 : index
    %c0_0 = arith.constant 0 : index
    %0 = vector.load %arg2[%c0, %c0_0] : memref<2x32xbf16, #tpu.memory_space<vmem>>, vector<2x32xbf16>
    %c0_1 = arith.constant 0 : index
    %c0_2 = arith.constant 0 : index
    %1 = vector.load %arg3[%c0_1, %c0_2] : memref<32x32xbf16, #tpu.memory_space<vmem>>, vector<32x32xbf16>
    %cst = arith.constant dense<0.000000e+00> : vector<2x32xf32>
    %2 = tpu.matmul %0, %1, %cst {dimension_numbers = #tpu.dot_dimension_numbers<[1], [0], [0], [1], [0, 0, 1, 1], [], []>} : vector<2x32xbf16>, vector<32x32xbf16>, vector<2x32xf32> -> vector<2x32xf32>
    %c0_3 = arith.constant 0 : index
    %c0_4 = arith.constant 0 : index
    %3 = vector.load %arg4[%c0_3, %c0_4] : memref<1x32xf32, #tpu.memory_space<vmem>>, vector<1x32xf32>
    %4 = vector.broadcast %3 : vector<1x32xf32> to vector<2x32xf32>
    %5 = arith.addf %2, %4 : vector<2x32xf32>
    %6 = math.tanh %5 : vector<2x32xf32>
    %c0_5 = arith.constant 0 : index
    %c0_6 = arith.constant 0 : index
    %7 = vector.load %arg5[%c0_5, %c0_6] : memref<2x32xf32, #tpu.memory_space<vmem>>, vector<2x32xf32>
    tpu.vector_store %arg5[%c0_5, %c0_6], %6 {strides = array<i32>} : memref<2x32xf32, #tpu.memory_space<vmem>>, vector<2x32xf32>,
    return
  }
  func.func @transform_0(%arg0: i32, %arg1: i32) -> (i32, i32) {
    %c0_i32 = arith.constant 0 : i32
    %c0_i32_0 = arith.constant 0 : i32
    return %arg1, %c0_i32 : i32, i32
  }
  func.func @transform_1(%arg0: i32, %arg1: i32) -> (i32, i32) {
    %c0_i32 = arith.constant 0 : i32
    %c0_i32_0 = arith.constant 0 : i32
    return %c0_i32, %arg0 : i32, i32
  }
  func.func @transform_2(%arg0: i32, %arg1: i32) -> (i32, i32) {
    %c0_i32 = arith.constant 0 : i32
    %c0_i32_0 = arith.constant 0 : i32
    return %c0_i32, %arg0 : i32, i32
  }
  func.func @transform_3(%arg0: i32, %arg1: i32) -> (i32, i32) {
    %c0_i32 = arith.constant 0 : i32
    return %arg1, %arg0 : i32, i32
  }
}

</mosaic_0001>

<llo_original>
// kernel: bert_classification_forward.1
$region0: #{bert_classification_forward.1}
  #allocation0 [shape = 'u32[]', space=smem, size = 0x4, offset = 0x4, fixed_abs, tag = 'smem constant byte address 0x4 - core index']
  #allocation1 [shape = 'u32[144,128]{1,0:T(1,128)}', space=vmem, size = 0x12000, scoped, tag = 'internal scratch']
  %s0 = inlined_call_operand.vmem [shape: bf16[2,32], index: 0, kind: input, shape index: {}]
  %s1 = inlined_call_operand.hbm [shape: bf16[32,32], index: 1, kind: input, shape index: {}]
  %s2 = inlined_call_operand.vmem [shape: f32[1,32], index: 2, kind: input, shape index: {}]
  %s3 = inlined_call_operand.hbm [shape: f32[2,32], index: 3, kind: output, shape index: {}]
  %s4 = sld [smem:[#allocation0]]
  $region26: #{bert_classification_forward.1} parent=0
    _
  %s6 = ssub.s32 1, %s4
  %s7 = scalar_select 0, %s6, %s4
  $region1: #{bert_classification_forward.1} parent=0
    #allocation2 [shape = 'u8[8192]{0}', space=vmem, size = 0x2000, scoped, tag = 'input window, operand 1, single buffered']
    #allocation3 [shape = 's32[1]{0}', space=sflag, size = 0x4, scoped, tag = 'scoped memory for bert_classification_forward.1']
    #allocation4 [shape = 's32[1]{0}', space=sflag, size = 0x4, scoped, tag = 'scoped memory for bert_classification_forward.1']
    #allocation5 [shape = 'u8[1024]{0}', space=vmem, size = 0x400, scoped, tag = 'output window, operand 0, single buffered']
    %8 = vsyncpa [#allocation3], 0
    %9 = vsyncpa [#allocation4], 0
    // Predicated region
    $region2: #{bert_classification_forward.1} parent=1 // pred_check
      _
    $region3: #{bert_classification_forward.1} parent=1 // pred_check_branch
      %11 = sbr.rel (0) target = $region5
    $region4: #{bert_classification_forward.1} parent=1 // pred_region
      _
    $region5: #{bert_classification_forward.1} parent=1 // pred_fallthru
      _
    // Predicated region
    $region6: #{bert_classification_forward.1} parent=1 // pred_check
      _
    $region7: #{bert_classification_forward.1} parent=1 // pred_check_branch
      %13 = sbr.rel (0) target = $region9
    $region8: #{bert_classification_forward.1} parent=1 // pred_region
      %s15 = ssub.s32 256, 256
      %16 = vsyncadd [#allocation3], %s15
      %s17 = sshll.u32 [#allocation2], 4
      %s18 = int_to_ptr.vmem [resolvable:$true] %s17
      %23 = dma.hbm_to_vmem [thread:$0]  %s1, 256, %s18, [#allocation3], 64, 64, 4
    $region9: #{bert_classification_forward.1} parent=1 // pred_fallthru
      _
    // Predicated region
    $region10: #{bert_classification_forward.1} parent=1 // pred_check
      _
    $region11: #{bert_classification_forward.1} parent=1 // pred_check_branch
      %25 = sbr.rel (0) target = $region13
    $region12: #{bert_classification_forward.1} parent=1 // pred_region
      _
    $region13: #{bert_classification_forward.1} parent=1 // pred_fallthru
      _
    // Predicated region
    $region14: #{bert_classification_forward.1} parent=1 // pred_check
      _
    $region15: #{bert_classification_forward.1} parent=1 // pred_check_branch
      %27 = sbr.rel (0) target = $region17
    $region16: #{bert_classification_forward.1} parent=1 // pred_region
      %28 = dma.done [#allocation3], 256
    $region17: #{bert_classification_forward.1} parent=1 // pred_fallthru
      _
    %v30 = vld [vmem:[%s0] sm:$0x1]
    %v31 = vld [vmem:[#allocation2] sm:$0xf]
    %v32 = vld [vmem:[#allocation2 + $0x4] sm:$0xf]
    %v33 = vld [vmem:[#allocation2 + $0x8] sm:$0xf]
    %v34 = vld [vmem:[#allocation2 + $0xc] sm:$0xf]
    %v35 = vld [vmem:[%s2] sm:$0x1]
    %v37 = vlaneseq
    %v38 = vshrl.u32 %v37, 7
    %v39 = vsub.s32 0, %v38
    %v40 = vrot.slane %v35, %v39
    %v46 = vunpack.c.l.b16 %v31
    %v47 = vunpack.c.l.b16 %v32
    %v48 = vunpack.c.l.b16 %v33
    %v49 = vunpack.c.l.b16 %v34
    %v50 = vpack.c.b16 %v47, %v46
    %v51 = vpack.c.b16 %v49, %v48
    %vm54 = vcmask 261120
    %v56 = vsel %vm54, %v30, 0
    %58 = vmatprep.subr.bf16.mxu0 0
    %59 = vmatpush1.bf16.msra.mxu0 0
    %60 = vmatprep.subr.bf16.mxu0 0
    %61 = vmatpush1.bf16.msra.mxu0 0
    %62 = vmatprep.subr.bf16.mxu0 0
    %63 = vmatpush1.bf16.msra.mxu0 0
    %64 = vmatprep.subr.bf16.mxu0 0
    %65 = vmatpush1.bf16.msra.mxu0 0
    %66 = vmatprep.subr.bf16.mxu0 0
    %67 = vmatpush1.bf16.msra.mxu0 0
    %68 = vmatprep.subr.bf16.mxu0 0
    %69 = vmatpush1.bf16.msra.mxu0 0
    %70 = vmatprep.subr.bf16.mxu0 0
    %71 = vmatpush1.bf16.msra.mxu0 %v51
    %72 = vmatprep.subr.bf16.mxu0 0
    %73 = vmatpush1.bf16.msra.mxu0 %v50
    %74 = vmatprep.subr.bf16.mxu0 0
    %75 = vmatpush2.bf16.msra.mxu0 0
    %76 = vmatprep.subr.bf16.mxu0 0
    %77 = vmatpush2.bf16.msra.mxu0 0
    %78 = vmatprep.subr.bf16.mxu0 0
    %79 = vmatpush2.bf16.msra.mxu0 0
    %80 = vmatprep.subr.bf16.mxu0 0
    %81 = vmatpush2.bf16.msra.mxu0 0
    %82 = vmatprep.subr.bf16.mxu0 0
    %83 = vmatpush2.bf16.msra.mxu0 0
    %84 = vmatprep.subr.bf16.mxu0 0
    %85 = vmatpush2.bf16.msra.mxu0 0
    %86 = vmatprep.subr.bf16.mxu0 0
    %87 = vmatpush2.bf16.msra.mxu0 0
    %88 = vmatprep.subr.bf16.mxu0 0
    %89 = vmatpush2.bf16.msra.mxu0 0
    %90 = vmatprep.mubr.bf16.mxu0 0
    %91 = vmatmul.mubr.bf16.gmra.mxu0 %v56
    %v92 = vpop.f32.mrf.mxu0
    %v93 = vadd.f32 %v40, %v92
    %v94 = vpop.f32.mrf.mxu0
    %v95 = vpop.f32.mrf.mxu0
    %v96 = vpop.f32.mrf.mxu0
    %97 = vdwg.mxu0
    %v98 = vtanh.pop %v93
    %vm99 = vcmask 254976
    %100 = vst.msk [vmem:[#allocation5] sm:$0x3] %vm99, %v98
    // Predicated region
    $region18: #{bert_classification_forward.1} parent=1 // pred_check
      _
    $region19: #{bert_classification_forward.1} parent=1 // pred_check_branch
      %102 = sbr.rel (0) target = $region21
    $region20: #{bert_classification_forward.1} parent=1 // pred_region
      %s104 = ssub.s32 32, 32
      %105 = vsyncadd [#allocation4], %s104
      %s107 = sshll.u32 [#allocation5], 4
      %s108 = int_to_ptr.vmem [resolvable:$true] %s107
      %110 = dma.vmem_to_hbm [thread:$0]  %s108, 32, %s3, [#allocation4]
    $region21: #{bert_classification_forward.1} parent=1 // pred_fallthru
      _
    // Predicated region
    $region22: #{bert_classification_forward.1} parent=1 // pred_check
      _
    $region23: #{bert_classification_forward.1} parent=1 // pred_check_branch
      %112 = sbr.rel (0) target = $region25
    $region24: #{bert_classification_forward.1} parent=1 // pred_region
      %113 = dma.done [#allocation4], 32
    $region25: #{bert_classification_forward.1} parent=1 // pred_fallthru
      _
    %114 = vsyncpa [#allocation3], 1
    %115 = vsyncpa [#allocation4], 1

</llo_original>
